<compile_context>
chip_gen: v7x
topology: tpu7x:2x2x1
jax: 0.10.0
libtpu: 0.0.40
codegen_flags: <defaults>
</compile_context>

<pallas_src>
import jax
import jax.numpy as jnp
from jax import lax
from jax.experimental import pallas as pl
from jax.experimental.pallas import tpu as pltpu

_NEG = -1e30  # finite "minus infinity" for padded logit columns (avoids inf-inf NaNs)


# ---------------------------------------------------------------------------
# Fused kernel: all hidden Linear+ReLU layers + final Linear+log_softmax.
# ---------------------------------------------------------------------------
def _make_fused_mlp_kernel(n_hidden):
    def kernel(*refs):
        # refs = (x, w0, b0, w1, b1, ..., w_out, b_out, o)
        x_ref = refs[0]
        o_ref = refs[-1]
        p_refs = refs[1:-1]

        h = x_ref[...]  # (tb, din_pad)  f32

        # Hidden layers: Linear -> ReLU  (dropout == identity in eval mode).
        for i in range(n_hidden):
            w = p_refs[2 * i][...]        # (din_pad, dout_pad)  already [in, out]
            b = p_refs[2 * i + 1][...]    # (1, dout_pad)
            z = lax.dot_general(
                h, w, (((1,), (0,)), ((), ())),
                preferred_element_type=jnp.float32,
            )
            h = jnp.maximum(z + b, 0.0)

        # Output layer: Linear -> log_softmax(dim=1).
        w_out = p_refs[-2][...]
        b_out = p_refs[-1][...]           # padded columns carry bias = _NEG
        z = lax.dot_general(
            h, w_out, (((1,), (0,)), ((), ())),
            preferred_element_type=jnp.float32,
        ) + b_out
        m = jnp.max(z, axis=-1, keepdims=True)
        s = z - m
        lse = jnp.log(jnp.sum(jnp.exp(s), axis=-1, keepdims=True))
        o_ref[...] = s - lse

    return kernel


# ---------------------------------------------------------------------------
# Padding helpers (run once in the wrapper, outside the kernel).
# ---------------------------------------------------------------------------
def _round_up(x, m):
    return ((x + m - 1) // m) * m


def _pad2d(a, rows, cols, value=0.0):
    pr, pc = rows - a.shape[0], cols - a.shape[1]
    if pr == 0 and pc == 0:
        return a
    return jnp.pad(a, ((0, pr), (0, pc)), constant_values=value)


# ---------------------------------------------------------------------------
# Wrapper: single pallas_call for the whole network.
# ---------------------------------------------------------------------------
def network_forward(x, hidden_params, output_params):
    x = x.astype(jnp.float32)
    B, Din = x.shape
    n_hidden = len(hidden_params)
    w_out, b_out = output_params
    Dout = w_out.shape[0]

    # ---- padded sizes (lane-dense: multiples of 128 on feature dims) -------
    din_p = _round_up(Din, 128)
    hidden_p = [_round_up(w.shape[0], 128) for w, _ in hidden_params]
    dout_p = _round_up(Dout, 128)

    # ---- batch tiling -------------------------------------------------------
    tb = min(_round_up(B, 8), 256)          # rows per grid step (sublane-aligned)
    b_p = _round_up(B, tb)
    grid = (b_p // tb,)

    x_p = _pad2d(x, b_p, din_p)

    # ---- pre-transpose + pad parameters (once, outside the kernel) ---------
    flat_params = []
    in_specs = [pl.BlockSpec((tb, din_p), lambda i: (i, 0))]
    prev_p = din_p
    for (w, b), hp in zip(hidden_params, hidden_p):
        wt = _pad2d(w.astype(jnp.float32).T, prev_p, hp)            # [in, out]
        bp = _pad2d(b.astype(jnp.float32).reshape(1, -1), 1, hp)
        flat_params += [wt, bp]
        in_specs += [
            pl.BlockSpec((prev_p, hp), lambda i: (0, 0)),   # weights resident
            pl.BlockSpec((1, hp), lambda i: (0, 0)),
        ]
        prev_p = hp

    wt_out = _pad2d(w_out.astype(jnp.float32).T, prev_p, dout_p)
    # Padded logit columns get bias = _NEG so they vanish inside log_softmax.
    bp_out = _pad2d(b_out.astype(jnp.float32).reshape(1, -1), 1, dout_p, value=_NEG)
    flat_params += [wt_out, bp_out]
    in_specs += [
        pl.BlockSpec((prev_p, dout_p), lambda i: (0, 0)),
        pl.BlockSpec((1, dout_p), lambda i: (0, 0)),
    ]

    out = pl.pallas_call(
        _make_fused_mlp_kernel(n_hidden),
        out_shape=jax.ShapeDtypeStruct((b_p, dout_p), jnp.float32),
        grid=grid,
        in_specs=in_specs,
        out_specs=pl.BlockSpec((tb, dout_p), lambda i: (i, 0)),
        compiler_params=pltpu.CompilerParams(
            dimension_semantics=("parallel",),   # v7x: shard batch over 2 TCs
            vmem_limit_bytes=64 * 1024 * 1024,
        ),
    )(x_p, *flat_params)

    # Slice away batch / class padding once, at the very end.
    return out[:B, :Dout]


network_forward_jit = jax.jit(network_forward)


# ---------------------------------------------------------------------------
# PyTorch-style parameter init (U(-1/sqrt(fan_in), 1/sqrt(fan_in))).
# ---------------------------------------------------------------------------
def init_params(key, input_size, output_size, hidden_sizes):
    sizes = [input_size] + list(hidden_sizes)
    params = []
    for i, (fan_in, fan_out) in enumerate(zip(sizes[:-1], sizes[1:])):
        kw, kb = jax.random.split(jax.random.fold_in(key, i))
        bound = 1.0 / jnp.sqrt(fan_in)
        w = jax.random.uniform(kw, (fan_out, fan_in), jnp.float32, -bound, bound)
        b = jax.random.uniform(kb, (fan_out,), jnp.float32, -bound, bound)
        params.append((w, b))
    kw, kb = jax.random.split(jax.random.fold_in(key, 1000))
    bound = 1.0 / jnp.sqrt(hidden_sizes[-1])
    w_out = jax.random.uniform(kw, (output_size, hidden_sizes[-1]), jnp.float32, -bound, bound)
    b_out = jax.random.uniform(kb, (output_size,), jnp.float32, -bound, bound)
    return params, (w_out, b_out)


def reference_forward(x, hidden_params, output_params):
    for w, b in hidden_params:
        x = jnp.maximum(x @ w.T + b, 0.0)
    w_out, b_out = output_params
    z = x @ w_out.T + b_out
    return jax.nn.log_softmax(z, axis=1)


if __name__ == "__main__":
    key = jax.random.PRNGKey(0)
    batch = 8
    input_size = 32
    hidden_sizes = [64, 32]
    output_size = 10

    kx, kp = jax.random.split(key)
    x = jax.random.normal(kx, (batch, input_size), dtype=jnp.float32)
    hidden_params, output_params = init_params(kp, input_size, output_size, hidden_sizes)

    out = network_forward_jit(x, tuple(hidden_params), output_params)
    out = jax.block_until_ready(out)

    ref = reference_forward(x, hidden_params, output_params)
    assert out.shape == (batch, output_size)
    assert jnp.allclose(out, ref, atol=1e-5, rtol=1e-5), "mismatch vs reference"
    # log_softmax rows should sum (in prob space) to ~1
    assert jnp.allclose(jnp.sum(jnp.exp(out), axis=1), 1.0, atol=1e-5)

    print("KERNEL_OK")
</pallas_src>

<mosaic_0001>
module attributes {stable_mosaic.version = 11 : i64} {
  func.func @kernel(%arg0: i32, %arg1: memref<8x128xf32, #tpu.memory_space<vmem>>, %arg2: memref<128x128xf32, #tpu.memory_space<vmem>>, %arg3: memref<1x128xf32, #tpu.memory_space<vmem>>, %arg4: memref<128x128xf32, #tpu.memory_space<vmem>>, %arg5: memref<1x128xf32, #tpu.memory_space<vmem>>, %arg6: memref<128x128xf32, #tpu.memory_space<vmem>>, %arg7: memref<1x128xf32, #tpu.memory_space<vmem>>, %arg8: memref<8x128xf32, #tpu.memory_space<vmem>>) attributes {dimension_semantics = [#tpu.dimension_semantics<parallel>], iteration_bounds = array<i64: 1>, scalar_prefetch = 0 : i64, scratch_operands = 0 : i64, tpu.core_type = #tpu.core_type<tc>, window_params = [{transform_indices = @transform_0, window_bounds = array<i64: 8, 128>}, {pipeline_mode = #tpu.pipeline_mode<synchronous>, transform_indices = @transform_1, window_bounds = array<i64: 128, 128>}, {pipeline_mode = #tpu.pipeline_mode<synchronous>, transform_indices = @transform_2, window_bounds = array<i64: 1, 128>}, {pipeline_mode = #tpu.pipeline_mode<synchronous>, transform_indices = @transform_3, window_bounds = array<i64: 128, 128>}, {pipeline_mode = #tpu.pipeline_mode<synchronous>, transform_indices = @transform_4, window_bounds = array<i64: 1, 128>}, {pipeline_mode = #tpu.pipeline_mode<synchronous>, transform_indices = @transform_5, window_bounds = array<i64: 128, 128>}, {pipeline_mode = #tpu.pipeline_mode<synchronous>, transform_indices = @transform_6, window_bounds = array<i64: 1, 128>}, {transform_indices = @transform_7, window_bounds = array<i64: 8, 128>}]} {
    %c0 = arith.constant 0 : index
    %c0_0 = arith.constant 0 : index
    %0 = vector.load %arg1[%c0, %c0_0] : memref<8x128xf32, #tpu.memory_space<vmem>>, vector<8x128xf32>
    %c0_1 = arith.constant 0 : index
    %c0_2 = arith.constant 0 : index
    %1 = vector.load %arg2[%c0_1, %c0_2] : memref<128x128xf32, #tpu.memory_space<vmem>>, vector<128x128xf32>
    %c0_3 = arith.constant 0 : index
    %c0_4 = arith.constant 0 : index
    %2 = vector.load %arg3[%c0_3, %c0_4] : memref<1x128xf32, #tpu.memory_space<vmem>>, vector<1x128xf32>
    %cst = arith.constant dense<0.000000e+00> : vector<8x128xf32>
    %3 = tpu.matmul %0, %1, %cst {dimension_numbers = #tpu.dot_dimension_numbers<[1], [0], [0], [1], [0, 0, 1, 1], [], []>} : vector<8x128xf32>, vector<128x128xf32>, vector<8x128xf32> -> vector<8x128xf32>
    %4 = vector.broadcast %2 : vector<1x128xf32> to vector<8x128xf32>
    %5 = arith.addf %3, %4 : vector<8x128xf32>
    %cst_5 = arith.constant 0.000000e+00 : f32
    %6 = vector.broadcast %cst_5 : f32 to vector<8x128xf32>
    %7 = arith.maximumf %5, %6 : vector<8x128xf32>
    %c0_6 = arith.constant 0 : index
    %c0_7 = arith.constant 0 : index
    %8 = vector.load %arg4[%c0_6, %c0_7] : memref<128x128xf32, #tpu.memory_space<vmem>>, vector<128x128xf32>
    %c0_8 = arith.constant 0 : index
    %c0_9 = arith.constant 0 : index
    %9 = vector.load %arg5[%c0_8, %c0_9] : memref<1x128xf32, #tpu.memory_space<vmem>>, vector<1x128xf32>
    %cst_10 = arith.constant dense<0.000000e+00> : vector<8x128xf32>
    %10 = tpu.matmul %7, %8, %cst_10 {dimension_numbers = #tpu.dot_dimension_numbers<[1], [0], [0], [1], [0, 0, 1, 1], [], []>} : vector<8x128xf32>, vector<128x128xf32>, vector<8x128xf32> -> vector<8x128xf32>
    %11 = vector.broadcast %9 : vector<1x128xf32> to vector<8x128xf32>
    %12 = arith.addf %10, %11 : vector<8x128xf32>
    %cst_11 = arith.constant 0.000000e+00 : f32
    %13 = vector.broadcast %cst_11 : f32 to vector<8x128xf32>
    %14 = arith.maximumf %12, %13 : vector<8x128xf32>
    %c0_12 = arith.constant 0 : index
    %c0_13 = arith.constant 0 : index
    %15 = vector.load %arg6[%c0_12, %c0_13] : memref<128x128xf32, #tpu.memory_space<vmem>>, vector<128x128xf32>
    %c0_14 = arith.constant 0 : index
    %c0_15 = arith.constant 0 : index
    %16 = vector.load %arg7[%c0_14, %c0_15] : memref<1x128xf32, #tpu.memory_space<vmem>>, vector<1x128xf32>
    %cst_16 = arith.constant dense<0.000000e+00> : vector<8x128xf32>
    %17 = tpu.matmul %14, %15, %cst_16 {dimension_numbers = #tpu.dot_dimension_numbers<[1], [0], [0], [1], [0, 0, 1, 1], [], []>} : vector<8x128xf32>, vector<128x128xf32>, vector<8x128xf32> -> vector<8x128xf32>
    %18 = vector.broadcast %16 : vector<1x128xf32> to vector<8x128xf32>
    %19 = arith.addf %17, %18 : vector<8x128xf32>
    %cst_17 = arith.constant dense<0xFF800000> : vector<8xf32>
    %20 = vector.multi_reduction <maximumf>, %19, %cst_17 [1] : vector<8x128xf32> to vector<8xf32>
    %21 = vector.shape_cast %20 : vector<8xf32> to vector<8x1xf32>
    %22 = vector.broadcast %21 : vector<8x1xf32> to vector<8x128xf32>
    %23 = arith.subf %19, %22 : vector<8x128xf32>
    %24 = math.exp %23 : vector<8x128xf32>
    %cst_18 = arith.constant dense<0.000000e+00> : vector<8xf32>
    %25 = vector.multi_reduction <add>, %24, %cst_18 [1] : vector<8x128xf32> to vector<8xf32>
    %26 = vector.shape_cast %25 : vector<8xf32> to vector<8x1xf32>
    %27 = math.log %26 : vector<8x1xf32>
    %28 = vector.broadcast %27 : vector<8x1xf32> to vector<8x128xf32>
    %29 = arith.subf %23, %28 : vector<8x128xf32>
    %c0_19 = arith.constant 0 : index
    %c0_20 = arith.constant 0 : index
    %30 = vector.load %arg8[%c0_19, %c0_20] : memref<8x128xf32, #tpu.memory_space<vmem>>, vector<8x128xf32>
    tpu.vector_store %arg8[%c0_19, %c0_20], %29 {strides = array<i32>} : memref<8x128xf32, #tpu.memory_space<vmem>>, vector<8x128xf32>,
    return
  }
  func.func @transform_0(%arg0: i32) -> (i32, i32) {
    %c0_i32 = arith.constant 0 : i32
    %c0_i32_0 = arith.constant 0 : i32
    return %arg0, %c0_i32 : i32, i32
  }
  func.func @transform_1(%arg0: i32) -> (i32, i32) {
    %c0_i32 = arith.constant 0 : i32
    %c0_i32_0 = arith.constant 0 : i32
    %c0_i32_1 = arith.constant 0 : i32
    return %c0_i32, %c0_i32_0 : i32, i32
  }
  func.func @transform_2(%arg0: i32) -> (i32, i32) {
    %c0_i32 = arith.constant 0 : i32
    %c0_i32_0 = arith.constant 0 : i32
    %c0_i32_1 = arith.constant 0 : i32
    return %c0_i32, %c0_i32_0 : i32, i32
  }
  func.func @transform_3(%arg0: i32) -> (i32, i32) {
    %c0_i32 = arith.constant 0 : i32
    %c0_i32_0 = arith.constant 0 : i32
    %c0_i32_1 = arith.constant 0 : i32
    return %c0_i32, %c0_i32_0 : i32, i32
  }
  func.func @transform_4(%arg0: i32) -> (i32, i32) {
    %c0_i32 = arith.constant 0 : i32
    %c0_i32_0 = arith.constant 0 : i32
    %c0_i32_1 = arith.constant 0 : i32
    return %c0_i32, %c0_i32_0 : i32, i32
  }
  func.func @transform_5(%arg0: i32) -> (i32, i32) {
    %c0_i32 = arith.constant 0 : i32
    %c0_i32_0 = arith.constant 0 : i32
    %c0_i32_1 = arith.constant 0 : i32
    return %c0_i32, %c0_i32_0 : i32, i32
  }
  func.func @transform_6(%arg0: i32) -> (i32, i32) {
    %c0_i32 = arith.constant 0 : i32
    %c0_i32_0 = arith.constant 0 : i32
    %c0_i32_1 = arith.constant 0 : i32
    return %c0_i32, %c0_i32_0 : i32, i32
  }
  func.func @transform_7(%arg0: i32) -> (i32, i32) {
    %c0_i32 = arith.constant 0 : i32
    %c0_i32_0 = arith.constant 0 : i32
    return %arg0, %c0_i32 : i32, i32
  }
}

</mosaic_0001>

<llo_original>
// kernel: network_forward.1
$region0: #{network_forward.1}
  #allocation0 [shape = 'u32[]', space=smem, size = 0x4, offset = 0x4, fixed_abs, tag = 'smem constant byte address 0x4 - core index']
  #allocation1 [shape = 'u32[144,128]{1,0:T(1,128)}', space=vmem, size = 0x12000, scoped, tag = 'internal scratch']
  %s0 = inlined_call_operand.hbm [shape: f32[8,128], index: 0, kind: input, shape index: {}]
  %s1 = inlined_call_operand.hbm [shape: f32[128,128], index: 1, kind: input, shape index: {}]
  %s2 = inlined_call_operand.hbm [shape: f32[1,128], index: 2, kind: input, shape index: {}]
  %s3 = inlined_call_operand.hbm [shape: f32[128,128], index: 3, kind: input, shape index: {}]
  %s4 = inlined_call_operand.hbm [shape: f32[1,128], index: 4, kind: input, shape index: {}]
  %s5 = inlined_call_operand.hbm [shape: f32[128,128], index: 5, kind: input, shape index: {}]
  %s6 = inlined_call_operand.hbm [shape: f32[1,128], index: 6, kind: input, shape index: {}]
  %s7 = inlined_call_operand.hbm [shape: f32[8,128], index: 7, kind: output, shape index: {}]
  %s8 = sld [smem:[#allocation0]]
  $region66: #{network_forward.1} parent=0
    _
  %s10 = ssub.s32 1, %s8
  %s11 = scalar_select 0, %s10, %s8
  $region1: #{network_forward.1} parent=0
    #allocation2 [shape = 'u8[4096]{0}', space=vmem, size = 0x1000, scoped, tag = 'input window, operand 0, single buffered']
    #allocation3 [shape = 's32[1]{0}', space=sflag, size = 0x4, scoped, tag = 'scoped memory for network_forward.1']
    #allocation4 [shape = 's32[1]{0}', space=sflag, size = 0x4, scoped, tag = 'scoped memory for network_forward.1']
    #allocation5 [shape = 'u8[65536]{0}', space=vmem, size = 0x10000, scoped, tag = 'input window, operand 1, single buffered']
    #allocation6 [shape = 's32[1]{0}', space=sflag, size = 0x4, scoped, tag = 'scoped memory for network_forward.1']
    #allocation7 [shape = 'u8[512]{0}', space=vmem, size = 0x400, scoped, tag = 'input window, operand 2, single buffered']
    #allocation8 [shape = 'u8[65536]{0}', space=vmem, size = 0x10000, scoped, tag = 'input window, operand 3, single buffered']
    #allocation9 [shape = 's32[1]{0}', space=sflag, size = 0x4, scoped, tag = 'scoped memory for network_forward.1']
    #allocation10 [shape = 'u8[512]{0}', space=vmem, size = 0x400, scoped, tag = 'input window, operand 4, single buffered']
    #allocation11 [shape = 'u8[65536]{0}', space=vmem, size = 0x10000, scoped, tag = 'input window, operand 5, single buffered']
    #allocation12 [shape = 's32[1]{0}', space=sflag, size = 0x4, scoped, tag = 'scoped memory for network_forward.1']
    #allocation13 [shape = 'u8[512]{0}', space=vmem, size = 0x400, scoped, tag = 'input window, operand 6, single buffered']
    #allocation14 [shape = 'u8[4096]{0}', space=vmem, size = 0x1000, scoped, tag = 'output window, operand 0, single buffered']
    %12 = vsyncpa [#allocation3], 0
    %13 = vsyncpa [#allocation6], 0
    %14 = vsyncpa [#allocation9], 0
    %15 = vsyncpa [#allocation12], 0
    %16 = vsyncpa [#allocation4], 0
    // Predicated region
    $region2: #{network_forward.1} parent=1 // pred_check
      _
    $region3: #{network_forward.1} parent=1 // pred_check_branch
      %18 = sbr.rel (0) target = $region5
    $region4: #{network_forward.1} parent=1 // pred_region
      %s20 = ssub.s32 128, 128
      %21 = vsyncadd [#allocation3], %s20
      %s23 = sshll.u32 [#allocation2], 4
      %s24 = int_to_ptr.vmem [resolvable:$true] %s23
      %26 = dma.hbm_to_vmem [thread:$0]  %s0, 128, %s24, [#allocation3]
    $region5: #{network_forward.1} parent=1 // pred_fallthru
      _
    // Predicated region
    $region6: #{network_forward.1} parent=1 // pred_check
      _
    $region7: #{network_forward.1} parent=1 // pred_check_branch
      %28 = sbr.rel (0) target = $region9
    $region8: #{network_forward.1} parent=1 // pred_region
      %s30 = ssub.s32 2048, 2048
      %31 = vsyncadd [#allocation6], %s30
      %s32 = sshll.u32 [#allocation5], 4
      %s33 = int_to_ptr.vmem [resolvable:$true] %s32
      %38 = dma.hbm_to_vmem [thread:$0]  %s1, 2048, %s33, [#allocation6], 128, 128, 8
    $region9: #{network_forward.1} parent=1 // pred_fallthru
      _
    // Predicated region
    $region10: #{network_forward.1} parent=1 // pred_check
      _
    $region11: #{network_forward.1} parent=1 // pred_check_branch
      %40 = sbr.rel (0) target = $region13
    $region12: #{network_forward.1} parent=1 // pred_region
      %s42 = ssub.s32 16, 16
      %43 = vsyncadd [#allocation6], %s42
      %s45 = sshll.u32 [#allocation7], 4
      %s46 = int_to_ptr.vmem [resolvable:$true] %s45
      %48 = dma.hbm_to_vmem [thread:$0]  %s2, 16, %s46, [#allocation6]
    $region13: #{network_forward.1} parent=1 // pred_fallthru
      _
    // Predicated region
    $region14: #{network_forward.1} parent=1 // pred_check
      _
    $region15: #{network_forward.1} parent=1 // pred_check_branch
      %50 = sbr.rel (0) target = $region17
    $region16: #{network_forward.1} parent=1 // pred_region
      %s52 = ssub.s32 2048, 2048
      %53 = vsyncadd [#allocation9], %s52
      %s54 = sshll.u32 [#allocation8], 4
      %s55 = int_to_ptr.vmem [resolvable:$true] %s54
      %60 = dma.hbm_to_vmem [thread:$0]  %s3, 2048, %s55, [#allocation9], 128, 128, 8
    $region17: #{network_forward.1} parent=1 // pred_fallthru
      _
    // Predicated region
    $region18: #{network_forward.1} parent=1 // pred_check
      _
    $region19: #{network_forward.1} parent=1 // pred_check_branch
      %62 = sbr.rel (0) target = $region21
    $region20: #{network_forward.1} parent=1 // pred_region
      %s64 = ssub.s32 16, 16
      %65 = vsyncadd [#allocation9], %s64
      %s67 = sshll.u32 [#allocation10], 4
      %s68 = int_to_ptr.vmem [resolvable:$true] %s67
      %70 = dma.hbm_to_vmem [thread:$0]  %s4, 16, %s68, [#allocation9]
    $region21: #{network_forward.1} parent=1 // pred_fallthru
      _
    // Predicated region
    $region22: #{network_forward.1} parent=1 // pred_check
      _
    $region23: #{network_forward.1} parent=1 // pred_check_branch
      %72 = sbr.rel (0) target = $region25
    $region24: #{network_forward.1} parent=1 // pred_region
      %s74 = ssub.s32 2048, 2048
      %75 = vsyncadd [#allocation12], %s74
      %s76 = sshll.u32 [#allocation11], 4
      %s77 = int_to_ptr.vmem [resolvable:$true] %s76
      %82 = dma.hbm_to_vmem [thread:$0]  %s5, 2048, %s77, [#allocation12], 128, 128, 8
    $region25: #{network_forward.1} parent=1 // pred_fallthru
      _
    // Predicated region
    $region26: #{network_forward.1} parent=1 // pred_check
      _
    $region27: #{network_forward.1} parent=1 // pred_check_branch
      %84 = sbr.rel (0) target = $region29
    $region28: #{network_forward.1} parent=1 // pred_region
      %s86 = ssub.s32 16, 16
      %87 = vsyncadd [#allocation12], %s86
      %s89 = sshll.u32 [#allocation13], 4
      %s90 = int_to_ptr.vmem [resolvable:$true] %s89
      %92 = dma.hbm_to_vmem [thread:$0]  %s6, 16, %s90, [#allocation12]
    $region29: #{network_forward.1} parent=1 // pred_fallthru
      _
    // Predicated region
    $region30: #{network_forward.1} parent=1 // pred_check
      _
    $region31: #{network_forward.1} parent=1 // pred_check_branch
      %94 = sbr.rel (0) target = $region33
    $region32: #{network_forward.1} parent=1 // pred_region
      %95 = dma.done [#allocation3], 128
    $region33: #{network_forward.1} parent=1 // pred_fallthru
      _
    // Predicated region
    $region34: #{network_forward.1} parent=1 // pred_check
      _
    $region35: #{network_forward.1} parent=1 // pred_check_branch
      %97 = sbr.rel (0) target = $region37
    $region36: #{network_forward.1} parent=1 // pred_region
      %98 = dma.done [#allocation6], 2048
    $region37: #{network_forward.1} parent=1 // pred_fallthru
      _
    // Predicated region
    $region38: #{network_forward.1} parent=1 // pred_check
      _
    $region39: #{network_forward.1} parent=1 // pred_check_branch
      %100 = sbr.rel (0) target = $region41
    $region40: #{network_forward.1} parent=1 // pred_region
      %101 = dma.done [#allocation6], 16
    $region41: #{network_forward.1} parent=1 // pred_fallthru
      _
    // Predicated region
    $region42: #{network_forward.1} parent=1 // pred_check
      _
    $region43: #{network_forward.1} parent=1 // pred_check_branch
      %103 = sbr.rel (0) target = $region45
    $region44: #{network_forward.1} parent=1 // pred_region
      %104 = dma.done [#allocation9], 2048
    $region45: #{network_forward.1} parent=1 // pred_fallthru
      _
    // Predicated region
    $region46: #{network_forward.1} parent=1 // pred_check
      _
    $region47: #{network_forward.1} parent=1 // pred_check_branch
      %106 = sbr.rel (0) target = $region49
    $region48: #{network_forward.1} parent=1 // pred_region
      %107 = dma.done [#allocation9], 16
    $region49: #{network_forward.1} parent=1 // pred_fallthru
      _
    // Predicated region
    $region50: #{network_forward.1} parent=1 // pred_check
      _
    $region51: #{network_forward.1} parent=1 // pred_check_branch
      %109 = sbr.rel (0) target = $region53
    $region52: #{network_forward.1} parent=1 // pred_region
      %110 = dma.done [#allocation12], 2048
    $region53: #{network_forward.1} parent=1 // pred_fallthru
      _
    // Predicated region
    $region54: #{network_forward.1} parent=1 // pred_check
      _
    $region55: #{network_forward.1} parent=1 // pred_check_branch
      %112 = sbr.rel (0) target = $region57
    $region56: #{network_forward.1} parent=1 // pred_region
      %113 = dma.done [#allocation12], 16
    $region57: #{network_forward.1} parent=1 // pred_fallthru
      _
    %v114 = vld [vmem:[#allocation2] sm:$0xff]
    %v115 = vld [vmem:[#allocation5] sm:$0xff]
    %v116 = vld [vmem:[#allocation5 + $0x8] sm:$0xff]
    %v117 = vld [vmem:[#allocation5 + $0x10] sm:$0xff]
    %v118 = vld [vmem:[#allocation5 + $0x18] sm:$0xff]
    %v119 = vld [vmem:[#allocation5 + $0x20] sm:$0xff]
    %v120 = vld [vmem:[#allocation5 + $0x28] sm:$0xff]
    %v121 = vld [vmem:[#allocation5 + $0x30] sm:$0xff]
    %v122 = vld [vmem:[#allocation5 + $0x38] sm:$0xff]
    %v123 = vld [vmem:[#allocation5 + $0x40] sm:$0xff]
    %v124 = vld [vmem:[#allocation5 + $0x48] sm:$0xff]
    %v125 = vld [vmem:[#allocation5 + $0x50] sm:$0xff]
    %v126 = vld [vmem:[#allocation5 + $0x58] sm:$0xff]
    %v127 = vld [vmem:[#allocation5 + $0x60] sm:$0xff]
    %v128 = vld [vmem:[#allocation5 + $0x68] sm:$0xff]
    %v129 = vld [vmem:[#allocation5 + $0x70] sm:$0xff]
    %v130 = vld [vmem:[#allocation5 + $0x78] sm:$0xff]
    %v131 = vld [vmem:[#allocation7] sm:$0x1]
    %v133 = vlaneseq
    %v134 = vshrl.u32 %v133, 7
    %v135 = vsub.s32 0, %v134
    %v136 = vrot.slane %v131, %v135
    %138 = vmatprep.subr.mxu0 0.0
    %139 = vmatpush1.msra.mxu0 %v115
    %140 = vmatprep.subr.mxu0 0.0
    %141 = vmatpush1.msra.mxu0 %v116
    %142 = vmatprep.subr.mxu0 0.0
    %143 = vmatpush1.msra.mxu0 %v117
    %144 = vmatprep.subr.mxu0 0.0
    %145 = vmatpush1.msra.mxu0 %v118
    %146 = vmatprep.subr.mxu0 0.0
    %147 = vmatpush1.msra.mxu0 %v119
    %148 = vmatprep.subr.mxu0 0.0
    %149 = vmatpush1.msra.mxu0 %v120
    %150 = vmatprep.subr.mxu0 0.0
    %151 = vmatpush1.msra.mxu0 %v121
    %152 = vmatprep.subr.mxu0 0.0
    %153 = vmatpush1.msra.mxu0 %v122
    %154 = vmatprep.subr.mxu0 0.0
    %155 = vmatpush1.msra.mxu0 %v123
    %156 = vmatprep.subr.mxu0 0.0
    %157 = vmatpush1.msra.mxu0 %v124
    %158 = vmatprep.subr.mxu0 0.0
    %159 = vmatpush1.msra.mxu0 %v125
    %160 = vmatprep.subr.mxu0 0.0
    %161 = vmatpush1.msra.mxu0 %v126
    %162 = vmatprep.subr.mxu0 0.0
    %163 = vmatpush1.msra.mxu0 %v127
    %164 = vmatprep.subr.mxu0 0.0
    %165 = vmatpush1.msra.mxu0 %v128
    %166 = vmatprep.subr.mxu0 0.0
    %167 = vmatpush1.msra.mxu0 %v129
    %168 = vmatprep.subr.mxu0 0.0
    %169 = vmatpush1.msra.mxu0 %v130
    %170 = vmatprep.subr.mxu0 0.0
    %171 = vmatpush1.msra.mxu0 0.0
    %172 = vmatprep.subr.mxu0 0.0
    %173 = vmatpush1.msra.mxu0 0.0
    %174 = vmatprep.subr.mxu0 0.0
    %175 = vmatpush1.msra.mxu0 0.0
    %176 = vmatprep.subr.mxu0 0.0
    %177 = vmatpush1.msra.mxu0 0.0
    %178 = vmatprep.subr.mxu0 0.0
    %179 = vmatpush1.msra.mxu0 0.0
    %180 = vmatprep.subr.mxu0 0.0
    %181 = vmatpush1.msra.mxu0 0.0
    %182 = vmatprep.subr.mxu0 0.0
    %183 = vmatpush1.msra.mxu0 0.0
    %184 = vmatprep.subr.mxu0 0.0
    %185 = vmatpush1.msra.mxu0 0.0
    %186 = vmatprep.subr.mxu0 0.0
    %187 = vmatpush1.msra.mxu0 0.0
    %188 = vmatprep.subr.mxu0 0.0
    %189 = vmatpush1.msra.mxu0 0.0
    %190 = vmatprep.subr.mxu0 0.0
    %191 = vmatpush1.msra.mxu0 0.0
    %192 = vmatprep.subr.mxu0 0.0
    %193 = vmatpush1.msra.mxu0 0.0
    %194 = vmatprep.subr.mxu0 0.0
    %195 = vmatpush1.msra.mxu0 0.0
    %196 = vmatprep.subr.mxu0 0.0
    %197 = vmatpush1.msra.mxu0 0.0
    %198 = vmatprep.subr.mxu0 0.0
    %199 = vmatpush1.msra.mxu0 0.0
    %200 = vmatprep.subr.mxu0 0.0
    %201 = vmatpush1.msra.mxu0 0.0
    %202 = vmatprep.mubr.f32.mxu0 0.0
    %203 = vmatmul.mubr.f32.gmra.mrb[0].mxu0 %v114
    %v204 = vpop.f32.mrb[0].mxu0
    %v205 = vadd.f32 %v136, %v204
    %v206 = vpop.f32.mrb[0].mxu0
    %207 = vdwg.mxu0
    %v208 = vmax.f32 %v205, 0.0
    %v209 = vld [vmem:[#allocation8] sm:$0xff]
    %v210 = vld [vmem:[#allocation8 + $0x8] sm:$0xff]
    %v211 = vld [vmem:[#allocation8 + $0x10] sm:$0xff]
    %v212 = vld [vmem:[#allocation8 + $0x18] sm:$0xff]
    %v213 = vld [vmem:[#allocation8 + $0x20] sm:$0xff]
    %v214 = vld [vmem:[#allocation8 + $0x28] sm:$0xff]
    %v215 = vld [vmem:[#allocation8 + $0x30] sm:$0xff]
    %v216 = vld [vmem:[#allocation8 + $0x38] sm:$0xff]
    %v217 = vld [vmem:[#allocation8 + $0x40] sm:$0xff]
    %v218 = vld [vmem:[#allocation8 + $0x48] sm:$0xff]
    %v219 = vld [vmem:[#allocation8 + $0x50] sm:$0xff]
    %v220 = vld [vmem:[#allocation8 + $0x58] sm:$0xff]
    %v221 = vld [vmem:[#allocation8 + $0x60] sm:$0xff]
    %v222 = vld [vmem:[#allocation8 + $0x68] sm:$0xff]
    %v223 = vld [vmem:[#allocation8 + $0x70] sm:$0xff]
    %v224 = vld [vmem:[#allocation8 + $0x78] sm:$0xff]
    %v225 = vld [vmem:[#allocation10] sm:$0x1]
    %v227 = vlaneseq
    %v228 = vshrl.u32 %v227, 7
    %v229 = vsub.s32 0, %v228
    %v230 = vrot.slane %v225, %v229
    %232 = vmatprep.subr.mxu0 0.0
    %233 = vmatpush1.msra.mxu0 %v209
    %234 = vmatprep.subr.mxu0 0.0
    %235 = vmatpush1.msra.mxu0 %v210
    %236 = vmatprep.subr.mxu0 0.0
    %237 = vmatpush1.msra.mxu0 %v211
    %238 = vmatprep.subr.mxu0 0.0
    %239 = vmatpush1.msra.mxu0 %v212
    %240 = vmatprep.subr.mxu0 0.0
    %241 = vmatpush1.msra.mxu0 %v213
    %242 = vmatprep.subr.mxu0 0.0
    %243 = vmatpush1.msra.mxu0 %v214
    %244 = vmatprep.subr.mxu0 0.0
    %245 = vmatpush1.msra.mxu0 %v215
    %246 = vmatprep.subr.mxu0 0.0
    %247 = vmatpush1.msra.mxu0 %v216
    %248 = vmatprep.subr.mxu0 0.0
    %249 = vmatpush1.msra.mxu0 %v217
    %250 = vmatprep.subr.mxu0 0.0
    %251 = vmatpush1.msra.mxu0 %v218
    %252 = vmatprep.subr.mxu0 0.0
    %253 = vmatpush1.msra.mxu0 %v219
    %254 = vmatprep.subr.mxu0 0.0
    %255 = vmatpush1.msra.mxu0 %v220
    %256 = vmatprep.subr.mxu0 0.0
    %257 = vmatpush1.msra.mxu0 %v221
    %258 = vmatprep.subr.mxu0 0.0
    %259 = vmatpush1.msra.mxu0 %v222
    %260 = vmatprep.subr.mxu0 0.0
    %261 = vmatpush1.msra.mxu0 %v223
    %262 = vmatprep.subr.mxu0 0.0
    %263 = vmatpush1.msra.mxu0 %v224
    %264 = vmatprep.subr.mxu0 0.0
    %265 = vmatpush1.msra.mxu0 0.0
    %266 = vmatprep.subr.mxu0 0.0
    %267 = vmatpush1.msra.mxu0 0.0
    %268 = vmatprep.subr.mxu0 0.0
    %269 = vmatpush1.msra.mxu0 0.0
    %270 = vmatprep.subr.mxu0 0.0
    %271 = vmatpush1.msra.mxu0 0.0
    %272 = vmatprep.subr.mxu0 0.0
    %273 = vmatpush1.msra.mxu0 0.0
    %274 = vmatprep.subr.mxu0 0.0
    %275 = vmatpush1.msra.mxu0 0.0
    %276 = vmatprep.subr.mxu0 0.0
    %277 = vmatpush1.msra.mxu0 0.0
    %278 = vmatprep.subr.mxu0 0.0
    %279 = vmatpush1.msra.mxu0 0.0
    %280 = vmatprep.subr.mxu0 0.0
    %281 = vmatpush1.msra.mxu0 0.0
    %282 = vmatprep.subr.mxu0 0.0
    %283 = vmatpush1.msra.mxu0 0.0
    %284 = vmatprep.subr.mxu0 0.0
    %285 = vmatpush1.msra.mxu0 0.0
    %286 = vmatprep.subr.mxu0 0.0
    %287 = vmatpush1.msra.mxu0 0.0
    %288 = vmatprep.subr.mxu0 0.0
    %289 = vmatpush1.msra.mxu0 0.0
    %290 = vmatprep.subr.mxu0 0.0
    %291 = vmatpush1.msra.mxu0 0.0
    %292 = vmatprep.subr.mxu0 0.0
    %293 = vmatpush1.msra.mxu0 0.0
    %294 = vmatprep.subr.mxu0 0.0
    %295 = vmatpush1.msra.mxu0 0.0
    %296 = vmatprep.mubr.f32.mxu0 0.0
    %297 = vmatmul.mubr.f32.gmra.mrb[0].mxu0 %v208
    %v298 = vpop.f32.mrb[0].mxu0
    %v299 = vadd.f32 %v230, %v298
    %v300 = vpop.f32.mrb[0].mxu0
    %301 = vdwg.mxu0
    %v302 = vmax.f32 %v299, 0.0
    %v303 = vld [vmem:[#allocation11] sm:$0xff]
    %v304 = vld [vmem:[#allocation11 + $0x8] sm:$0xff]
    %v305 = vld [vmem:[#allocation11 + $0x10] sm:$0xff]
    %v306 = vld [vmem:[#allocation11 + $0x18] sm:$0xff]
    %v307 = vld [vmem:[#allocation11 + $0x20] sm:$0xff]
    %v308 = vld [vmem:[#allocation11 + $0x28] sm:$0xff]
    %v309 = vld [vmem:[#allocation11 + $0x30] sm:$0xff]
    %v310 = vld [vmem:[#allocation11 + $0x38] sm:$0xff]
    %v311 = vld [vmem:[#allocation11 + $0x40] sm:$0xff]
    %v312 = vld [vmem:[#allocation11 + $0x48] sm:$0xff]
    %v313 = vld [vmem:[#allocation11 + $0x50] sm:$0xff]
    %v314 = vld [vmem:[#allocation11 + $0x58] sm:$0xff]
    %v315 = vld [vmem:[#allocation11 + $0x60] sm:$0xff]
    %v316 = vld [vmem:[#allocation11 + $0x68] sm:$0xff]
    %v317 = vld [vmem:[#allocation11 + $0x70] sm:$0xff]
    %v318 = vld [vmem:[#allocation11 + $0x78] sm:$0xff]
    %v319 = vld [vmem:[#allocation13] sm:$0x1]
    %v321 = vlaneseq
    %v322 = vshrl.u32 %v321, 7
    %v323 = vsub.s32 0, %v322
    %v324 = vrot.slane %v319, %v323
    %326 = vmatprep.subr.mxu0 0.0
    %327 = vmatpush1.msra.mxu0 %v303
    %328 = vmatprep.subr.mxu0 0.0
    %329 = vmatpush1.msra.mxu0 %v304
    %330 = vmatprep.subr.mxu0 0.0
    %331 = vmatpush1.msra.mxu0 %v305
    %332 = vmatprep.subr.mxu0 0.0
    %333 = vmatpush1.msra.mxu0 %v306
    %334 = vmatprep.subr.mxu0 0.0
    %335 = vmatpush1.msra.mxu0 %v307
    %336 = vmatprep.subr.mxu0 0.0
    %337 = vmatpush1.msra.mxu0 %v308
    %338 = vmatprep.subr.mxu0 0.0
    %339 = vmatpush1.msra.mxu0 %v309
    %340 = vmatprep.subr.mxu0 0.0
    %341 = vmatpush1.msra.mxu0 %v310
    %342 = vmatprep.subr.mxu0 0.0
    %343 = vmatpush1.msra.mxu0 %v311
    %344 = vmatprep.subr.mxu0 0.0
    %345 = vmatpush1.msra.mxu0 %v312
    %346 = vmatprep.subr.mxu0 0.0
    %347 = vmatpush1.msra.mxu0 %v313
    %348 = vmatprep.subr.mxu0 0.0
    %349 = vmatpush1.msra.mxu0 %v314
    %350 = vmatprep.subr.mxu0 0.0
    %351 = vmatpush1.msra.mxu0 %v315
    %352 = vmatprep.subr.mxu0 0.0
    %353 = vmatpush1.msra.mxu0 %v316
    %354 = vmatprep.subr.mxu0 0.0
    %355 = vmatpush1.msra.mxu0 %v317
    %356 = vmatprep.subr.mxu0 0.0
    %357 = vmatpush1.msra.mxu0 %v318
    %358 = vmatprep.subr.mxu0 0.0
    %359 = vmatpush1.msra.mxu0 0.0
    %360 = vmatprep.subr.mxu0 0.0
    %361 = vmatpush1.msra.mxu0 0.0
    %362 = vmatprep.subr.mxu0 0.0
    %363 = vmatpush1.msra.mxu0 0.0
    %364 = vmatprep.subr.mxu0 0.0
    %365 = vmatpush1.msra.mxu0 0.0
    %366 = vmatprep.subr.mxu0 0.0
    %367 = vmatpush1.msra.mxu0 0.0
    %368 = vmatprep.subr.mxu0 0.0
    %369 = vmatpush1.msra.mxu0 0.0
    %370 = vmatprep.subr.mxu0 0.0
    %371 = vmatpush1.msra.mxu0 0.0
    %372 = vmatprep.subr.mxu0 0.0
    %373 = vmatpush1.msra.mxu0 0.0
    %374 = vmatprep.subr.mxu0 0.0
    %375 = vmatpush1.msra.mxu0 0.0
    %376 = vmatprep.subr.mxu0 0.0
    %377 = vmatpush1.msra.mxu0 0.0
    %378 = vmatprep.subr.mxu0 0.0
    %379 = vmatpush1.msra.mxu0 0.0
    %380 = vmatprep.subr.mxu0 0.0
    %381 = vmatpush1.msra.mxu0 0.0
    %382 = vmatprep.subr.mxu0 0.0
    %383 = vmatpush1.msra.mxu0 0.0
    %384 = vmatprep.subr.mxu0 0.0
    %385 = vmatpush1.msra.mxu0 0.0
    %386 = vmatprep.subr.mxu0 0.0
    %387 = vmatpush1.msra.mxu0 0.0
    %388 = vmatprep.subr.mxu0 0.0
    %389 = vmatpush1.msra.mxu0 0.0
    %390 = vmatprep.mubr.f32.mxu0 0.0
    %391 = vmatmul.mubr.f32.gmra.mrb[0].mxu0 %v302
    %v392 = vpop.f32.mrb[0].mxu0
    %v393 = vadd.f32 %v324, %v392
    %v394 = vpop.f32.mrb[0].mxu0
    %395 = vdwg.mxu0
    %396 = vmax.xlane.f32.xlu0 %v393
    %v397 = vpop.xlane.xlu0 %396
    %v398 = vsub.f32 %v393, %v397
    %v399 = vmul.f32 %v398, 1.442695
    %v400 = vpow.pop %v399
    %401 = vadd.xlane.f32.xlu0 %v400
    %v402 = vpop.xlane.xlu0 %401
    %v403 = vlog2.pop %v402
    %v404 = vmul.f32 %v403, 0.6931472
    %v405 = vsub.f32 %v398, %v404
    %406 = vst [vmem:[#allocation14] sm:$0xff] %v405
    // Predicated region
    $region58: #{network_forward.1} parent=1 // pred_check
      _
    $region59: #{network_forward.1} parent=1 // pred_check_branch
      %408 = sbr.rel (0) target = $region61
    $region60: #{network_forward.1} parent=1 // pred_region
      %s410 = ssub.s32 128, 128
      %411 = vsyncadd [#allocation4], %s410
      %s413 = sshll.u32 [#allocation14], 4
      %s414 = int_to_ptr.vmem [resolvable:$true] %s413
      %416 = dma.vmem_to_hbm [thread:$0]  %s414, 128, %s7, [#allocation4]
    $region61: #{network_forward.1} parent=1 // pred_fallthru
      _
    // Predicated region
    $region62: #{network_forward.1} parent=1 // pred_check
      _
    $region63: #{network_forward.1} parent=1 // pred_check_branch
      %418 = sbr.rel (0) target = $region65
    $region64: #{network_forward.1} parent=1 // pred_region
      %419 = dma.done [#allocation4], 128
    $region65: #{network_forward.1} parent=1 // pred_fallthru
      _
    %420 = vsyncpa [#allocation3], 1
    %421 = vsyncpa [#allocation6], 1
    %422 = vsyncpa [#allocation9], 1
    %423 = vsyncpa [#allocation12], 1
    %424 = vsyncpa [#allocation4], 1

</llo_original>
